<compile_context>
chip_gen: v6e
topology: v6e:2x2x1
jax: 0.10.0
libtpu: 0.0.40
codegen_flags: <defaults>
</compile_context>

<pallas_src>
import functools

import jax
import jax.numpy as jnp
import numpy as np
from jax.experimental import pallas as pl
from jax.experimental.pallas import tpu as pltpu

# ---- module constants (from Caps1D.__init__) -------------------------------
DIGITAL_CAPSLEN = 16                      # out_channels
PRIMARY_CAPSLEN = 8                       # in_channels
NUM_CAPS = 2
NUM_ITERATIONS = 3
FILTERS, KS, NEURONS, STRIDE = 32, 5, 714, 2
FULL_NUM_ROUTES = (int((NEURONS - KS) / STRIDE) + 1) * FILTERS   # = 11360

_NEG_INF = -1e30


def _squash(s):
    # squash along the last dim: (norm/(1+norm)) * s / sqrt(norm)
    # (rsqrt goes to the EUP slot; matches the torch expression numerically,
    #  including the NaN-at-zero behaviour of the original)
    norm = jnp.sum(s * s, axis=-1, keepdims=True)
    return s * (norm / (1.0 + norm)) * jax.lax.rsqrt(norm)


# ---- Pallas kernel: batched capsule routing, routes on the lane axis --------
def _caps_routing_kernel(u_ref, w_ref, v_ref, *, r_real):
    # u_ref: (TB, 8, Rp)   w_ref: (2, 8, 16, Rp)   v_ref: (TB, 2, 16)
    tb = u_ref.shape[0]
    rp = u_ref.shape[-1]

    u = u_ref[...]                                   # (TB, 8, Rp)
    W = w_ref[...]                                   # (2, 8, 16, Rp)

    # u_ji[b, k, o, r] = sum_i u[b, i, r] * W[k, i, o, r]
    # 8-term VPU multiply-accumulate; lane-dense, no (2, R, 8, 16) temporary.
    u_ji = u[:, 0, :][:, None, None, :] * W[:, 0, :, :][None]
    for i in range(1, PRIMARY_CAPSLEN):
        u_ji = u_ji + u[:, i, :][:, None, None, :] * W[:, i, :, :][None]
    # u_ji: (TB, 2, 16, Rp); padded lanes are exactly 0 (u/W padded with zeros).

    # --- iteration 0: b == 0  =>  c == 1/R exactly (skip the softmax) --------
    inv_r = 1.0 / float(r_real)
    s = jnp.sum(u_ji * inv_r, axis=-1)               # (TB, 2, 16)
    v = _squash(s)

    # routing logits: single copy per route (torch's 16 copies are identical).
    # Padded lanes start at -inf so they never contribute to the softmax.
    if rp == r_real:
        blog = jnp.zeros((tb, NUM_CAPS, rp), jnp.float32)
    else:
        lane = jax.lax.broadcasted_iota(jnp.int32, (tb, NUM_CAPS, rp), 2)
        blog = jnp.where(lane < r_real, 0.0, _NEG_INF).astype(jnp.float32)

    # --- remaining routing iterations ----------------------------------------
    for _ in range(NUM_ITERATIONS - 1):
        # logit update: delta_b[b, k, r] = sum_o u_ji[b, k, o, r] * v[b, k, o]
        delta = jnp.sum(u_ji * v[:, :, :, None], axis=2)        # (TB, 2, Rp)
        blog = blog + delta                                     # pad lanes: +0

        # softmax over routes (lane axis)
        bmax = jnp.max(blog, axis=-1, keepdims=True)
        e = jnp.exp(blog - bmax)                                # pad lanes -> 0
        c = e / jnp.sum(e, axis=-1, keepdims=True)              # (TB, 2, Rp)

        s = jnp.sum(c[:, :, None, :] * u_ji, axis=-1)           # (TB, 2, 16)
        v = _squash(s)

    v_ref[...] = v                                              # (TB, 2, 16)


# ---- wrapper -----------------------------------------------------------------
def caps1d_forward(u, W, *, batch_block=None):
    """u: (B, R, 8) f32,  W: (2, R, 8, 16) f32 -> (classes (B, 2), f (B, 32))."""
    B, R, cin = u.shape
    assert cin == PRIMARY_CAPSLEN
    assert W.shape == (NUM_CAPS, R, PRIMARY_CAPSLEN, DIGITAL_CAPSLEN)

    # Lane-dense layout: routes on the last (128-lane) axis, padded + masked.
    rp = ((R + 127) // 128) * 128
    u_t = jnp.transpose(u, (0, 2, 1))                # (B, 8, R)
    w_t = jnp.transpose(W, (0, 2, 3, 1))             # (2, 8, 16, R)
    if rp != R:
        u_t = jnp.pad(u_t, ((0, 0), (0, 0), (0, rp - R)))
        w_t = jnp.pad(w_t, ((0, 0), (0, 0), (0, 0), (0, rp - R)))

    # Batch blocking: amortize per-step pipeline overhead, but keep >= 2 grid
    # steps when B >= 2 so both v7x TensorCores get work.
    if batch_block is None:
        batch_block = max(1, min(8, B // 2))
    tb = max(1, min(batch_block, B))
    bp = ((B + tb - 1) // tb) * tb
    if bp != B:
        u_t = jnp.pad(u_t, ((0, bp - B), (0, 0), (0, 0)))

    v = pl.pallas_call(
        functools.partial(_caps_routing_kernel, r_real=R),
        out_shape=jax.ShapeDtypeStruct((bp, NUM_CAPS, DIGITAL_CAPSLEN), jnp.float32),
        grid_spec=pltpu.PrefetchScalarGridSpec(
            num_scalar_prefetch=0,
            grid=(bp // tb,),
            in_specs=[
                pl.BlockSpec((tb, PRIMARY_CAPSLEN, rp), lambda b: (b, 0, 0)),
                # W is grid-invariant (constant index_map): fetched once, kept
                # resident by the pipeline across batch steps.
                pl.BlockSpec((NUM_CAPS, PRIMARY_CAPSLEN, DIGITAL_CAPSLEN, rp),
                             lambda b: (0, 0, 0, 0)),
            ],
            out_specs=pl.BlockSpec((tb, NUM_CAPS, DIGITAL_CAPSLEN),
                                   lambda b: (b, 0, 0)),
        ),
        compiler_params=pltpu.CompilerParams(
            dimension_semantics=("parallel",),
            # default scoped VMEM is sufficient after the lane-dense layout;
            # no explicit vmem_limit_bytes (96 MiB would exceed v7x's 64 MiB).
        ),
    )(u_t, w_t)

    v = v[:B]                                        # drop batch padding
    # tiny glue (B x 2 x 16): flatten + class probabilities, as in the torch return
    f = v.reshape(B, -1)                             # (B, 32)
    classes = jnp.sqrt(jnp.sum(v * v, axis=-1))      # (B, 2)
    classes = jax.nn.softmax(classes, axis=1)        # F.softmax default dim for 2D
    return classes, f


# ---- pure-JAX reference (mirrors the torch code) -----------------------------
def caps1d_reference(u, W):
    u_ji = jnp.matmul(u[:, None, :, None, :], W)     # (B, 2, R, 1, 16)
    b = jnp.zeros_like(u_ji)
    v = None
    for i in range(NUM_ITERATIONS):
        c = jax.nn.softmax(b, axis=2)
        s = jnp.sum(c * u_ji, axis=2, keepdims=True)
        norm = jnp.sum(s * s, axis=-1, keepdims=True)
        v = (norm / (1.0 + norm)) * s / jnp.sqrt(norm)
        if i != NUM_ITERATIONS - 1:
            b = b + jnp.sum(u_ji * v, axis=-1, keepdims=True)
    v = jnp.squeeze(v)                               # (B, 2, 16)
    f = v.reshape(v.shape[0], -1)
    classes = jnp.sqrt(jnp.sum(v ** 2, axis=-1))
    classes = jax.nn.softmax(classes, axis=1)
    return classes, f


if __name__ == "__main__":
    # Small demo shapes. The full module implies R = FULL_NUM_ROUTES = 11360
    # (output of a Conv1d front-end not part of this forward); reduced R here,
    # keeping in_channels=8, out_channels=16, num_caps=2, 3 iterations.
    B = 2
    key = jax.random.PRNGKey(0)

    for R in (200, 256):   # 200 exercises the lane-pad masking path; 256 is exact
        kw, ku = jax.random.split(jax.random.fold_in(key, R))
        W = jax.random.normal(
            kw, (NUM_CAPS, R, PRIMARY_CAPSLEN, DIGITAL_CAPSLEN), dtype=jnp.float32)
        u = jax.random.normal(ku, (B, R, PRIMARY_CAPSLEN), dtype=jnp.float32)

        classes, f = jax.block_until_ready(caps1d_forward(u, W))
        classes_ref, f_ref = jax.block_until_ready(caps1d_reference(u, W))

        np.testing.assert_allclose(np.asarray(classes), np.asarray(classes_ref),
                                   rtol=1e-4, atol=1e-4)
        np.testing.assert_allclose(np.asarray(f), np.asarray(f_ref),
                                   rtol=1e-4, atol=1e-4)

    print("KERNEL_OK")
</pallas_src>

<mosaic_0001>
module attributes {stable_mosaic.version = 11 : i64} {
  func.func @_caps_routing_kernel(%arg0: i32, %arg1: memref<1x8x256xf32, #tpu.memory_space<vmem>>, %arg2: memref<2x8x16x256xf32, #tpu.memory_space<vmem>>, %arg3: memref<1x2x16xf32, #tpu.memory_space<vmem>>) attributes {dimension_semantics = [#tpu.dimension_semantics<parallel>], iteration_bounds = array<i64: 2>, scalar_prefetch = 0 : i64, scratch_operands = 0 : i64, tpu.core_type = #tpu.core_type<tc>, window_params = [{transform_indices = @transform_0, window_bounds = array<i64: 1, 8, 256>}, {pipeline_mode = #tpu.pipeline_mode<synchronous>, transform_indices = @transform_1, window_bounds = array<i64: 2, 8, 16, 256>}, {transform_indices = @transform_2, window_bounds = array<i64: 1, 2, 16>}]} {
    %c0 = arith.constant 0 : index
    %c0_0 = arith.constant 0 : index
    %c0_1 = arith.constant 0 : index
    %0 = vector.load %arg1[%c0, %c0_0, %c0_1] : memref<1x8x256xf32, #tpu.memory_space<vmem>>, vector<1x8x256xf32>
    %c0_2 = arith.constant 0 : index
    %c0_3 = arith.constant 0 : index
    %c0_4 = arith.constant 0 : index
    %c0_5 = arith.constant 0 : index
    %1 = vector.load %arg2[%c0_2, %c0_3, %c0_4, %c0_5] : memref<2x8x16x256xf32, #tpu.memory_space<vmem>>, vector<2x8x16x256xf32>
    %2 = vector.extract_strided_slice %0 {offsets = [0, 0, 0], sizes = [1, 1, 256], strides = [1, 1, 1]} : vector<1x8x256xf32> to vector<1x1x256xf32>
    %3 = vector.shape_cast %2 : vector<1x1x256xf32> to vector<1x256xf32>
    %4 = vector.shape_cast %3 : vector<1x256xf32> to vector<1x1x1x256xf32>
    %5 = vector.extract_strided_slice %1 {offsets = [0, 0, 0, 0], sizes = [2, 1, 16, 256], strides = [1, 1, 1, 1]} : vector<2x8x16x256xf32> to vector<2x1x16x256xf32>
    %6 = vector.shape_cast %5 : vector<2x1x16x256xf32> to vector<2x16x256xf32>
    %7 = vector.shape_cast %6 : vector<2x16x256xf32> to vector<1x2x16x256xf32>
    %8 = vector.broadcast %4 : vector<1x1x1x256xf32> to vector<1x2x16x256xf32>
    %9 = arith.mulf %8, %7 : vector<1x2x16x256xf32>
    %10 = vector.extract_strided_slice %0 {offsets = [0, 1, 0], sizes = [1, 1, 256], strides = [1, 1, 1]} : vector<1x8x256xf32> to vector<1x1x256xf32>
    %11 = vector.shape_cast %10 : vector<1x1x256xf32> to vector<1x256xf32>
    %12 = vector.shape_cast %11 : vector<1x256xf32> to vector<1x1x1x256xf32>
    %13 = vector.extract_strided_slice %1 {offsets = [0, 1, 0, 0], sizes = [2, 1, 16, 256], strides = [1, 1, 1, 1]} : vector<2x8x16x256xf32> to vector<2x1x16x256xf32>
    %14 = vector.shape_cast %13 : vector<2x1x16x256xf32> to vector<2x16x256xf32>
    %15 = vector.shape_cast %14 : vector<2x16x256xf32> to vector<1x2x16x256xf32>
    %16 = vector.broadcast %12 : vector<1x1x1x256xf32> to vector<1x2x16x256xf32>
    %17 = arith.mulf %16, %15 : vector<1x2x16x256xf32>
    %18 = arith.addf %9, %17 : vector<1x2x16x256xf32>
    %19 = vector.extract_strided_slice %0 {offsets = [0, 2, 0], sizes = [1, 1, 256], strides = [1, 1, 1]} : vector<1x8x256xf32> to vector<1x1x256xf32>
    %20 = vector.shape_cast %19 : vector<1x1x256xf32> to vector<1x256xf32>
    %21 = vector.shape_cast %20 : vector<1x256xf32> to vector<1x1x1x256xf32>
    %22 = vector.extract_strided_slice %1 {offsets = [0, 2, 0, 0], sizes = [2, 1, 16, 256], strides = [1, 1, 1, 1]} : vector<2x8x16x256xf32> to vector<2x1x16x256xf32>
    %23 = vector.shape_cast %22 : vector<2x1x16x256xf32> to vector<2x16x256xf32>
    %24 = vector.shape_cast %23 : vector<2x16x256xf32> to vector<1x2x16x256xf32>
    %25 = vector.broadcast %21 : vector<1x1x1x256xf32> to vector<1x2x16x256xf32>
    %26 = arith.mulf %25, %24 : vector<1x2x16x256xf32>
    %27 = arith.addf %18, %26 : vector<1x2x16x256xf32>
    %28 = vector.extract_strided_slice %0 {offsets = [0, 3, 0], sizes = [1, 1, 256], strides = [1, 1, 1]} : vector<1x8x256xf32> to vector<1x1x256xf32>
    %29 = vector.shape_cast %28 : vector<1x1x256xf32> to vector<1x256xf32>
    %30 = vector.shape_cast %29 : vector<1x256xf32> to vector<1x1x1x256xf32>
    %31 = vector.extract_strided_slice %1 {offsets = [0, 3, 0, 0], sizes = [2, 1, 16, 256], strides = [1, 1, 1, 1]} : vector<2x8x16x256xf32> to vector<2x1x16x256xf32>
    %32 = vector.shape_cast %31 : vector<2x1x16x256xf32> to vector<2x16x256xf32>
    %33 = vector.shape_cast %32 : vector<2x16x256xf32> to vector<1x2x16x256xf32>
    %34 = vector.broadcast %30 : vector<1x1x1x256xf32> to vector<1x2x16x256xf32>
    %35 = arith.mulf %34, %33 : vector<1x2x16x256xf32>
    %36 = arith.addf %27, %35 : vector<1x2x16x256xf32>
    %37 = vector.extract_strided_slice %0 {offsets = [0, 4, 0], sizes = [1, 1, 256], strides = [1, 1, 1]} : vector<1x8x256xf32> to vector<1x1x256xf32>
    %38 = vector.shape_cast %37 : vector<1x1x256xf32> to vector<1x256xf32>
    %39 = vector.shape_cast %38 : vector<1x256xf32> to vector<1x1x1x256xf32>
    %40 = vector.extract_strided_slice %1 {offsets = [0, 4, 0, 0], sizes = [2, 1, 16, 256], strides = [1, 1, 1, 1]} : vector<2x8x16x256xf32> to vector<2x1x16x256xf32>
    %41 = vector.shape_cast %40 : vector<2x1x16x256xf32> to vector<2x16x256xf32>
    %42 = vector.shape_cast %41 : vector<2x16x256xf32> to vector<1x2x16x256xf32>
    %43 = vector.broadcast %39 : vector<1x1x1x256xf32> to vector<1x2x16x256xf32>
    %44 = arith.mulf %43, %42 : vector<1x2x16x256xf32>
    %45 = arith.addf %36, %44 : vector<1x2x16x256xf32>
    %46 = vector.extract_strided_slice %0 {offsets = [0, 5, 0], sizes = [1, 1, 256], strides = [1, 1, 1]} : vector<1x8x256xf32> to vector<1x1x256xf32>
    %47 = vector.shape_cast %46 : vector<1x1x256xf32> to vector<1x256xf32>
    %48 = vector.shape_cast %47 : vector<1x256xf32> to vector<1x1x1x256xf32>
    %49 = vector.extract_strided_slice %1 {offsets = [0, 5, 0, 0], sizes = [2, 1, 16, 256], strides = [1, 1, 1, 1]} : vector<2x8x16x256xf32> to vector<2x1x16x256xf32>
    %50 = vector.shape_cast %49 : vector<2x1x16x256xf32> to vector<2x16x256xf32>
    %51 = vector.shape_cast %50 : vector<2x16x256xf32> to vector<1x2x16x256xf32>
    %52 = vector.broadcast %48 : vector<1x1x1x256xf32> to vector<1x2x16x256xf32>
    %53 = arith.mulf %52, %51 : vector<1x2x16x256xf32>
    %54 = arith.addf %45, %53 : vector<1x2x16x256xf32>
    %55 = vector.extract_strided_slice %0 {offsets = [0, 6, 0], sizes = [1, 1, 256], strides = [1, 1, 1]} : vector<1x8x256xf32> to vector<1x1x256xf32>
    %56 = vector.shape_cast %55 : vector<1x1x256xf32> to vector<1x256xf32>
    %57 = vector.shape_cast %56 : vector<1x256xf32> to vector<1x1x1x256xf32>
    %58 = vector.extract_strided_slice %1 {offsets = [0, 6, 0, 0], sizes = [2, 1, 16, 256], strides = [1, 1, 1, 1]} : vector<2x8x16x256xf32> to vector<2x1x16x256xf32>
    %59 = vector.shape_cast %58 : vector<2x1x16x256xf32> to vector<2x16x256xf32>
    %60 = vector.shape_cast %59 : vector<2x16x256xf32> to vector<1x2x16x256xf32>
    %61 = vector.broadcast %57 : vector<1x1x1x256xf32> to vector<1x2x16x256xf32>
    %62 = arith.mulf %61, %60 : vector<1x2x16x256xf32>
    %63 = arith.addf %54, %62 : vector<1x2x16x256xf32>
    %64 = vector.extract_strided_slice %0 {offsets = [0, 7, 0], sizes = [1, 1, 256], strides = [1, 1, 1]} : vector<1x8x256xf32> to vector<1x1x256xf32>
    %65 = vector.shape_cast %64 : vector<1x1x256xf32> to vector<1x256xf32>
    %66 = vector.shape_cast %65 : vector<1x256xf32> to vector<1x1x1x256xf32>
    %67 = vector.extract_strided_slice %1 {offsets = [0, 7, 0, 0], sizes = [2, 1, 16, 256], strides = [1, 1, 1, 1]} : vector<2x8x16x256xf32> to vector<2x1x16x256xf32>
    %68 = vector.shape_cast %67 : vector<2x1x16x256xf32> to vector<2x16x256xf32>
    %69 = vector.shape_cast %68 : vector<2x16x256xf32> to vector<1x2x16x256xf32>
    %70 = vector.broadcast %66 : vector<1x1x1x256xf32> to vector<1x2x16x256xf32>
    %71 = arith.mulf %70, %69 : vector<1x2x16x256xf32>
    %72 = arith.addf %63, %71 : vector<1x2x16x256xf32>
    %cst = arith.constant 5.000000e-03 : f32
    %73 = vector.broadcast %cst : f32 to vector<1x2x16x256xf32>
    %74 = arith.mulf %72, %73 : vector<1x2x16x256xf32>
    %cst_6 = arith.constant dense<0.000000e+00> : vector<1x2x16xf32>
    %75 = vector.multi_reduction <add>, %74, %cst_6 [3] : vector<1x2x16x256xf32> to vector<1x2x16xf32>
    %76 = arith.mulf %75, %75 : vector<1x2x16xf32>
    %cst_7 = arith.constant dense<0.000000e+00> : vector<1x2xf32>
    %77 = vector.multi_reduction <add>, %76, %cst_7 [2] : vector<1x2x16xf32> to vector<1x2xf32>
    %78 = vector.shape_cast %77 : vector<1x2xf32> to vector<1x2x1xf32>
    %cst_8 = arith.constant 1.000000e+00 : f32
    %79 = vector.broadcast %cst_8 : f32 to vector<1x2x1xf32>
    %80 = arith.addf %79, %78 : vector<1x2x1xf32>
    %81 = arith.divf %78, %80 : vector<1x2x1xf32>
    %82 = vector.broadcast %81 : vector<1x2x1xf32> to vector<1x2x16xf32>
    %83 = arith.mulf %75, %82 : vector<1x2x16xf32>
    %84 = math.rsqrt %78 : vector<1x2x1xf32>
    %85 = vector.broadcast %84 : vector<1x2x1xf32> to vector<1x2x16xf32>
    %86 = arith.mulf %83, %85 : vector<1x2x16xf32>
    %87 = tpu.iota {dimensions = array<i32: 2>} : vector<1x2x256xi32>
    %c200_i32 = arith.constant 200 : i32
    %88 = vector.broadcast %c200_i32 : i32 to vector<1x2x256xi32>
    %89 = arith.cmpi slt, %87, %88 : vector<1x2x256xi32>
    %cst_9 = arith.constant 0.000000e+00 : f32
    %cst_10 = arith.constant -1.000000e+30 : f32
    %90 = vector.broadcast %cst_9 : f32 to vector<1x2x256xf32>
    %91 = vector.broadcast %cst_10 : f32 to vector<1x2x256xf32>
    %92 = arith.select %89, %90, %91 : vector<1x2x256xi1>, vector<1x2x256xf32>
    %93 = vector.shape_cast %86 : vector<1x2x16xf32> to vector<1x2x16x1xf32>
    %94 = vector.broadcast %93 : vector<1x2x16x1xf32> to vector<1x2x16x256xf32>
    %95 = arith.mulf %72, %94 : vector<1x2x16x256xf32>
    %cst_11 = arith.constant dense<0.000000e+00> : vector<1x2x256xf32>
    %96 = vector.multi_reduction <add>, %95, %cst_11 [2] : vector<1x2x16x256xf32> to vector<1x2x256xf32>
    %97 = arith.addf %92, %96 : vector<1x2x256xf32>
    %cst_12 = arith.constant dense<0xFF800000> : vector<1x2xf32>
    %98 = vector.multi_reduction <maximumf>, %97, %cst_12 [2] : vector<1x2x256xf32> to vector<1x2xf32>
    %99 = vector.shape_cast %98 : vector<1x2xf32> to vector<1x2x1xf32>
    %100 = vector.broadcast %99 : vector<1x2x1xf32> to vector<1x2x256xf32>
    %101 = arith.subf %97, %100 : vector<1x2x256xf32>
    %102 = math.exp %101 : vector<1x2x256xf32>
    %cst_13 = arith.constant dense<0.000000e+00> : vector<1x2xf32>
    %103 = vector.multi_reduction <add>, %102, %cst_13 [2] : vector<1x2x256xf32> to vector<1x2xf32>
    %104 = vector.shape_cast %103 : vector<1x2xf32> to vector<1x2x1xf32>
    %105 = vector.broadcast %104 : vector<1x2x1xf32> to vector<1x2x256xf32>
    %106 = arith.divf %102, %105 : vector<1x2x256xf32>
    %107 = vector.shape_cast %106 : vector<1x2x256xf32> to vector<1x2x1x256xf32>
    %108 = vector.broadcast %107 : vector<1x2x1x256xf32> to vector<1x2x16x256xf32>
    %109 = arith.mulf %108, %72 : vector<1x2x16x256xf32>
    %cst_14 = arith.constant dense<0.000000e+00> : vector<1x2x16xf32>
    %110 = vector.multi_reduction <add>, %109, %cst_14 [3] : vector<1x2x16x256xf32> to vector<1x2x16xf32>
    %111 = arith.mulf %110, %110 : vector<1x2x16xf32>
    %cst_15 = arith.constant dense<0.000000e+00> : vector<1x2xf32>
    %112 = vector.multi_reduction <add>, %111, %cst_15 [2] : vector<1x2x16xf32> to vector<1x2xf32>
    %113 = vector.shape_cast %112 : vector<1x2xf32> to vector<1x2x1xf32>
    %cst_16 = arith.constant 1.000000e+00 : f32
    %114 = vector.broadcast %cst_16 : f32 to vector<1x2x1xf32>
    %115 = arith.addf %114, %113 : vector<1x2x1xf32>
    %116 = arith.divf %113, %115 : vector<1x2x1xf32>
    %117 = vector.broadcast %116 : vector<1x2x1xf32> to vector<1x2x16xf32>
    %118 = arith.mulf %110, %117 : vector<1x2x16xf32>
    %119 = math.rsqrt %113 : vector<1x2x1xf32>
    %120 = vector.broadcast %119 : vector<1x2x1xf32> to vector<1x2x16xf32>
    %121 = arith.mulf %118, %120 : vector<1x2x16xf32>
    %122 = vector.shape_cast %121 : vector<1x2x16xf32> to vector<1x2x16x1xf32>
    %123 = vector.broadcast %122 : vector<1x2x16x1xf32> to vector<1x2x16x256xf32>
    %124 = arith.mulf %72, %123 : vector<1x2x16x256xf32>
    %cst_17 = arith.constant dense<0.000000e+00> : vector<1x2x256xf32>
    %125 = vector.multi_reduction <add>, %124, %cst_17 [2] : vector<1x2x16x256xf32> to vector<1x2x256xf32>
    %126 = arith.addf %97, %125 : vector<1x2x256xf32>
    %cst_18 = arith.constant dense<0xFF800000> : vector<1x2xf32>
    %127 = vector.multi_reduction <maximumf>, %126, %cst_18 [2] : vector<1x2x256xf32> to vector<1x2xf32>
    %128 = vector.shape_cast %127 : vector<1x2xf32> to vector<1x2x1xf32>
    %129 = vector.broadcast %128 : vector<1x2x1xf32> to vector<1x2x256xf32>
    %130 = arith.subf %126, %129 : vector<1x2x256xf32>
    %131 = math.exp %130 : vector<1x2x256xf32>
    %cst_19 = arith.constant dense<0.000000e+00> : vector<1x2xf32>
    %132 = vector.multi_reduction <add>, %131, %cst_19 [2] : vector<1x2x256xf32> to vector<1x2xf32>
    %133 = vector.shape_cast %132 : vector<1x2xf32> to vector<1x2x1xf32>
    %134 = vector.broadcast %133 : vector<1x2x1xf32> to vector<1x2x256xf32>
    %135 = arith.divf %131, %134 : vector<1x2x256xf32>
    %136 = vector.shape_cast %135 : vector<1x2x256xf32> to vector<1x2x1x256xf32>
    %137 = vector.broadcast %136 : vector<1x2x1x256xf32> to vector<1x2x16x256xf32>
    %138 = arith.mulf %137, %72 : vector<1x2x16x256xf32>
    %cst_20 = arith.constant dense<0.000000e+00> : vector<1x2x16xf32>
    %139 = vector.multi_reduction <add>, %138, %cst_20 [3] : vector<1x2x16x256xf32> to vector<1x2x16xf32>
    %140 = arith.mulf %139, %139 : vector<1x2x16xf32>
    %cst_21 = arith.constant dense<0.000000e+00> : vector<1x2xf32>
    %141 = vector.multi_reduction <add>, %140, %cst_21 [2] : vector<1x2x16xf32> to vector<1x2xf32>
    %142 = vector.shape_cast %141 : vector<1x2xf32> to vector<1x2x1xf32>
    %cst_22 = arith.constant 1.000000e+00 : f32
    %143 = vector.broadcast %cst_22 : f32 to vector<1x2x1xf32>
    %144 = arith.addf %143, %142 : vector<1x2x1xf32>
    %145 = arith.divf %142, %144 : vector<1x2x1xf32>
    %146 = vector.broadcast %145 : vector<1x2x1xf32> to vector<1x2x16xf32>
    %147 = arith.mulf %139, %146 : vector<1x2x16xf32>
    %148 = math.rsqrt %142 : vector<1x2x1xf32>
    %149 = vector.broadcast %148 : vector<1x2x1xf32> to vector<1x2x16xf32>
    %150 = arith.mulf %147, %149 : vector<1x2x16xf32>
    %c0_23 = arith.constant 0 : index
    %c0_24 = arith.constant 0 : index
    %c0_25 = arith.constant 0 : index
    %151 = vector.load %arg3[%c0_23, %c0_24, %c0_25] : memref<1x2x16xf32, #tpu.memory_space<vmem>>, vector<1x2x16xf32>
    tpu.vector_store %arg3[%c0_23, %c0_24, %c0_25], %150 {strides = array<i32>} : memref<1x2x16xf32, #tpu.memory_space<vmem>>, vector<1x2x16xf32>,
    return
  }
  func.func @transform_0(%arg0: i32) -> (i32, i32, i32) {
    %c0_i32 = arith.constant 0 : i32
    %c0_i32_0 = arith.constant 0 : i32
    %c0_i32_1 = arith.constant 0 : i32
    return %arg0, %c0_i32, %c0_i32_0 : i32, i32, i32
  }
  func.func @transform_1(%arg0: i32) -> (i32, i32, i32, i32) {
    %c0_i32 = arith.constant 0 : i32
    %c0_i32_0 = arith.constant 0 : i32
    %c0_i32_1 = arith.constant 0 : i32
    %c0_i32_2 = arith.constant 0 : i32
    %c0_i32_3 = arith.constant 0 : i32
    return %c0_i32, %c0_i32_0, %c0_i32_1, %c0_i32_2 : i32, i32, i32, i32
  }
  func.func @transform_2(%arg0: i32) -> (i32, i32, i32) {
    %c0_i32 = arith.constant 0 : i32
    %c0_i32_0 = arith.constant 0 : i32
    %c0_i32_1 = arith.constant 0 : i32
    return %arg0, %c0_i32, %c0_i32_0 : i32, i32, i32
  }
}

</mosaic_0001>

<llo_original>
// kernel: tpu_custom_call.1
$region0: #{tpu_custom_call.1}
  #allocation0 [shape = 'u32[]', space=smem, size = 0x4, offset = 0x4, fixed_abs, tag = 'smem constant byte address 0x4 - core index']
  #allocation1 [shape = 'u32[144,128]{1,0:T(1,128)}', space=vmem, size = 0x12000, scoped, tag = 'internal scratch']
  %s0 = inlined_call_operand.hbm [shape: f32[2,8,256], index: 0, kind: input, shape index: {}]
  %s1 = inlined_call_operand.hbm [shape: f32[2,8,16,256], index: 1, kind: input, shape index: {}]
  %s2 = inlined_call_operand.hbm [shape: f32[2,2,16], index: 2, kind: output, shape index: {}]
  %s3 = sld [smem:[#allocation0]]
  $region49: #{tpu_custom_call.1} parent=0
    _
  %s5 = ssub.s32 1, %s3
  %s6 = scalar_select 0, %s5, %s3
  $region1: #{tpu_custom_call.1} parent=0
    #allocation2 [shape = 'u8[16384]{0}', space=vmem, size = 0x4000, scoped, tag = 'input window, operand 0']
    #allocation3 [shape = 's32[2]{0}', space=sflag, size = 0x8, scoped, tag = 'scoped memory for tpu_custom_call.1']
    #allocation4 [shape = 's32[2]{0}', space=sflag, size = 0x8, scoped, tag = 'scoped memory for tpu_custom_call.1']
    #allocation5 [shape = 'u8[262144]{0}', space=vmem, size = 0x40000, scoped, tag = 'input window, operand 1, single buffered']
    #allocation6 [shape = 's32[1]{0}', space=sflag, size = 0x4, scoped, tag = 'scoped memory for tpu_custom_call.1']
    #allocation7 [shape = 'u8[2048]{0}', space=vmem, size = 0x800, scoped, tag = 'output window, operand 0']
    %7 = vsyncpa [#allocation3], 0
    %s8 = scalar_lea.sflag [#allocation3], 1
    %9 = vsyncpa %s8, 0
    %10 = vsyncpa [#allocation6], 0
    %11 = vsyncpa [#allocation4], 0
    %s12 = scalar_lea.sflag [#allocation4], 1
    %13 = vsyncpa %s12, 0
    loop: start=0, step=1, limit=4
    $region2: #{tpu_custom_call.1} parent=1 // loop_pre_header
      _
    $region3: #{tpu_custom_call.1} parent=1 // loop_header
      %s15 = sphi 0, %s19
      %p16 = scmp.ge.s32.totalorder %s15, 4
      %s25 = sphi 0, %s27
      %s28 = sphi 0, %s25
      %s29 = sphi 0, %s28
      %s45 = sphi 0, %s29
      %s49 = sphi 0, %s49
      %s51 = sphi 0, %s49
      %s52 = sphi 0, %s51
      %s66 = sphi 0, %s52
      %s72 = sphi 0, %s74
      %s75 = sphi 0, %s72
      %s76 = sphi 0, %s75
      %s92 = sphi 0, %s76
    $region4: #{tpu_custom_call.1} parent=1 // loop_header_branch
      %18 = sbr.rel (%p16) target = $region8
    $region5: #{tpu_custom_call.1} parent=1 // loop_body
      %s20 = ssub.s32 %s15, 1
      %s21 = ssub.s32 %s15, 2
      %s22 = sadd.s32 %s15, 1
      %s23 = ssub.s32 %s15, %s22
      %p24 = scmp.eq.s32.totalorder %s23, 0
      %s26 = sadd.s32 %s25, 1
      %s27 = scalar_select %p24, %s25, %s26
      %p30 = pneg %p24
      %p31 = scmp.eq.s32.totalorder %s15, 1
      %p32 = por %p30, %p31
      %p33 = scmp.ne.s32.totalorder %s25, %s28
      %p34 = scmp.eq.s32.totalorder %s15, 0
      %p35 = por %p33, %p34
      %p36 = scmp.ne.s32.totalorder %s25, %s28
      %p37 = scmp.eq.s32.totalorder %s20, 1
      %p38 = por %p36, %p37
      %p39 = scmp.ne.s32.totalorder %s28, %s29
      %p40 = scmp.eq.s32.totalorder %s20, 0
      %p41 = por %p39, %p40
      %p42 = scmp.ne.s32.totalorder %s28, %s29
      %p43 = scmp.eq.s32.totalorder %s21, 1
      %p44 = por %p42, %p43
      %p46 = scmp.ne.s32.totalorder %s29, %s45
      %p47 = scmp.eq.s32.totalorder %s21, 0
      %p48 = por %p46, %p47
      %s50 = sadd.s32 %s49, 1
      %p53 = scmp.eq.s32.totalorder %s15, 1
      %p54 = scmp.ne.s32.totalorder %s49, %s51
      %p55 = scmp.eq.s32.totalorder %s15, 0
      %p56 = por %p54, %p55
      %p57 = scmp.ne.s32.totalorder %s49, %s51
      %p58 = scmp.eq.s32.totalorder %s20, 1
      %p59 = por %p57, %p58
      %p60 = scmp.ne.s32.totalorder %s51, %s52
      %p61 = scmp.eq.s32.totalorder %s20, 0
      %p62 = por %p60, %p61
      %p63 = scmp.ne.s32.totalorder %s51, %s52
      %p64 = scmp.eq.s32.totalorder %s21, 1
      %p65 = por %p63, %p64
      %p67 = scmp.ne.s32.totalorder %s52, %s66
      %p68 = scmp.eq.s32.totalorder %s21, 0
      %p69 = por %p67, %p68
      %s70 = ssub.s32 %s15, %s22
      %p71 = scmp.eq.s32.totalorder %s70, 0
      %s73 = sadd.s32 %s72, 1
      %s74 = scalar_select %p71, %s72, %s73
      %p77 = pneg %p71
      %p78 = scmp.eq.s32.totalorder %s15, 1
      %p79 = por %p77, %p78
      %p80 = scmp.ne.s32.totalorder %s72, %s75
      %p81 = scmp.eq.s32.totalorder %s15, 0
      %p82 = por %p80, %p81
      %p83 = scmp.ne.s32.totalorder %s72, %s75
      %p84 = scmp.eq.s32.totalorder %s20, 1
      %p85 = por %p83, %p84
      %p86 = scmp.ne.s32.totalorder %s75, %s76
      %p87 = scmp.eq.s32.totalorder %s20, 0
      %p88 = por %p86, %p87
      %p89 = scmp.ne.s32.totalorder %s75, %s76
      %p90 = scmp.eq.s32.totalorder %s21, 1
      %p91 = por %p89, %p90
      %p93 = scmp.ne.s32.totalorder %s76, %s92
      %p94 = scmp.eq.s32.totalorder %s21, 0
      %p95 = por %p93, %p94
      %p96 = scmp.le.s32.totalorder 1, %s15
      %p97 = scmp.lt.s32.totalorder %s15, 3
      %p98 = pnand %p96, %p97
      %p99 = pneg %p98
      // Predicated region
      $region9: #{tpu_custom_call.1} parent=5 // pred_check
        _
      $region10: #{tpu_custom_call.1} parent=5 // pred_check_branch
        %101 = sbr.rel (%p98) target = $region12
      $region11: #{tpu_custom_call.1} parent=5 // pred_region
        %s102 = ssub.s32 %s15, 1
        // Predicated region
        $region13: #{tpu_custom_call.1} parent=11 // pred_check
          %p103 = pneg %p62
        $region14: #{tpu_custom_call.1} parent=11 // pred_check_branch
          %105 = sbr.rel (%p103) target = $region16
        $region15: #{tpu_custom_call.1} parent=11 // pred_region
          %s107 = ssub.s32 8192, 8192
          %108 = vsyncadd [#allocation6], %s107
          %s109 = sshll.u32 [#allocation5], 4
          %s110 = int_to_ptr.vmem [resolvable:$true] %s109
          %115 = dma.hbm_to_vmem [thread:$0]  %s1, 8192, %s110, [#allocation6], 256, 256, 16
        $region16: #{tpu_custom_call.1} parent=11 // pred_fallthru
          _
      $region12: #{tpu_custom_call.1} parent=5 // pred_fallthru
        _
      %p116 = scmp.lt.s32.totalorder %s15, 2
      // Predicated region
      $region17: #{tpu_custom_call.1} parent=5 // pred_check
        %p117 = pneg %p116
      $region18: #{tpu_custom_call.1} parent=5 // pred_check_branch
        %119 = sbr.rel (%p117) target = $region20
      $region19: #{tpu_custom_call.1} parent=5 // pred_region
        // Predicated region
        $region21: #{tpu_custom_call.1} parent=19 // pred_check
          %p120 = pneg %p35
        $region22: #{tpu_custom_call.1} parent=19 // pred_check_branch
          %122 = sbr.rel (%p120) target = $region24
        $region23: #{tpu_custom_call.1} parent=19 // pred_region
          %s123 = sand.u32 %s25, 1
          %s124 = scalar_lea.sflag [#allocation3], %s123
          %s125 = sand.u32 %s25, 1
          %s126 = smul.addr %s125, 16
          %s127 = scalar_lea.vmem [#allocation2], %s126
          %s129 = ssub.s32 256, 256
          %130 = vsyncadd %s124, %s129
          %s131 = smul.addr %s15, 2
          %s132 = smul.addr %s131, 128
          %s133 = scalar_lea.hbm %s0, %s132
          %s135 = sshll.u32 %s127, 4
          %s136 = int_to_ptr.vmem [resolvable:$true] %s135
          %138 = dma.hbm_to_vmem [thread:$0]  %s133, 256, %s136, %s124
        $region24: #{tpu_custom_call.1} parent=19 // pred_fallthru
          _
      $region20: #{tpu_custom_call.1} parent=5 // pred_fallthru
        _
      %p139 = scmp.le.s32.totalorder 1, %s15
      %p140 = scmp.lt.s32.totalorder %s15, 3
      %p141 = pnand %p139, %p140
      %p142 = pneg %p141
      // Predicated region
      $region25: #{tpu_custom_call.1} parent=5 // pred_check
        _
      $region26: #{tpu_custom_call.1} parent=5 // pred_check_branch
        %144 = sbr.rel (%p141) target = $region28
      $region27: #{tpu_custom_call.1} parent=5 // pred_region
        %s145 = ssub.s32 %s15, 1
        %s146 = sand.u32 %s28, 1
        %s147 = scalar_lea.sflag [#allocation3], %s146
        %s148 = sand.u32 %s28, 1
        %s149 = smul.addr %s148, 16
        %s150 = scalar_lea.vmem [#allocation2], %s149
        // Predicated region
        $region29: #{tpu_custom_call.1} parent=27 // pred_check
          %p151 = pneg %p41
        $region30: #{tpu_custom_call.1} parent=27 // pred_check_branch
          %153 = sbr.rel (%p151) target = $region32
        $region31: #{tpu_custom_call.1} parent=27 // pred_region
          %154 = dma.done %s147, 256
        $region32: #{tpu_custom_call.1} parent=27 // pred_fallthru
          _
        // Predicated region
        $region33: #{tpu_custom_call.1} parent=27 // pred_check
          %p155 = pneg %p62
        $region34: #{tpu_custom_call.1} parent=27 // pred_check_branch
          %157 = sbr.rel (%p155) target = $region36
        $region35: #{tpu_custom_call.1} parent=27 // pred_region
          %158 = dma.done [#allocation6], 8192
        $region36: #{tpu_custom_call.1} parent=27 // pred_fallthru
          _
        %s159 = sand.u32 %s28, 1
        %s160 = scalar_lea.sflag [#allocation3], %s159
        %s161 = sand.u32 %s28, 1
        %s162 = smul.addr %s161, 16
        %s163 = scalar_lea.vmem [#allocation2], %s162
        %p164 = pneg %p41
        %p165 = pneg %p38
        %p166 = pneg %p62
        %p167 = pneg %p59
        %p168 = pneg %p88
        %p169 = pneg %p85
        %s170 = sand.u32 %s75, 1
        %s171 = scalar_lea.sflag [#allocation4], %s170
        %s172 = sand.u32 %s75, 1
        %s173 = smul.addr %s172, 2
        %s174 = scalar_lea.vmem [#allocation7], %s173
        %v175 = vld [vmem:[%s150] sm:$0xff]
        %v176 = vld [vmem:[%s150 + $0x8] sm:$0xff]
        %v177 = vld [vmem:[#allocation5] sm:$0xff]
        %v178 = vld [vmem:[#allocation5 + $0x8] sm:$0xff]
        %v179 = vld [vmem:[#allocation5 + $0x10] sm:$0xff]
        %v180 = vld [vmem:[#allocation5 + $0x18] sm:$0xff]
        %v181 = vld [vmem:[#allocation5 + $0x20] sm:$0xff]
        %v182 = vld [vmem:[#allocation5 + $0x28] sm:$0xff]
        %v183 = vld [vmem:[#allocation5 + $0x30] sm:$0xff]
        %v184 = vld [vmem:[#allocation5 + $0x38] sm:$0xff]
        %v185 = vld [vmem:[#allocation5 + $0x40] sm:$0xff]
        %v186 = vld [vmem:[#allocation5 + $0x48] sm:$0xff]
        %v187 = vld [vmem:[#allocation5 + $0x50] sm:$0xff]
        %v188 = vld [vmem:[#allocation5 + $0x58] sm:$0xff]
        %v189 = vld [vmem:[#allocation5 + $0x60] sm:$0xff]
        %v190 = vld [vmem:[#allocation5 + $0x68] sm:$0xff]
        %v191 = vld [vmem:[#allocation5 + $0x70] sm:$0xff]
        %v192 = vld [vmem:[#allocation5 + $0x78] sm:$0xff]
        %v193 = vld [vmem:[#allocation5 + $0x80] sm:$0xff]
        %v194 = vld [vmem:[#allocation5 + $0x88] sm:$0xff]
        %v195 = vld [vmem:[#allocation5 + $0x90] sm:$0xff]
        %v196 = vld [vmem:[#allocation5 + $0x98] sm:$0xff]
        %v197 = vld [vmem:[#allocation5 + $0xa0] sm:$0xff]
        %v198 = vld [vmem:[#allocation5 + $0xa8] sm:$0xff]
        %v199 = vld [vmem:[#allocation5 + $0xb0] sm:$0xff]
        %v200 = vld [vmem:[#allocation5 + $0xb8] sm:$0xff]
        %v201 = vld [vmem:[#allocation5 + $0xc0] sm:$0xff]
        %v202 = vld [vmem:[#allocation5 + $0xc8] sm:$0xff]
        %v203 = vld [vmem:[#allocation5 + $0xd0] sm:$0xff]
        %v204 = vld [vmem:[#allocation5 + $0xd8] sm:$0xff]
        %v205 = vld [vmem:[#allocation5 + $0xe0] sm:$0xff]
        %v206 = vld [vmem:[#allocation5 + $0xe8] sm:$0xff]
        %v207 = vld [vmem:[#allocation5 + $0xf0] sm:$0xff]
        %v208 = vld [vmem:[#allocation5 + $0xf8] sm:$0xff]
        %v209 = vld [vmem:[#allocation5 + $0x100] sm:$0xff]
        %v210 = vld [vmem:[#allocation5 + $0x108] sm:$0xff]
        %v211 = vld [vmem:[#allocation5 + $0x110] sm:$0xff]
        %v212 = vld [vmem:[#allocation5 + $0x118] sm:$0xff]
        %v213 = vld [vmem:[#allocation5 + $0x120] sm:$0xff]
        %v214 = vld [vmem:[#allocation5 + $0x128] sm:$0xff]
        %v215 = vld [vmem:[#allocation5 + $0x130] sm:$0xff]
        %v216 = vld [vmem:[#allocation5 + $0x138] sm:$0xff]
        %v217 = vld [vmem:[#allocation5 + $0x140] sm:$0xff]
        %v218 = vld [vmem:[#allocation5 + $0x148] sm:$0xff]
        %v219 = vld [vmem:[#allocation5 + $0x150] sm:$0xff]
        %v220 = vld [vmem:[#allocation5 + $0x158] sm:$0xff]
        %v221 = vld [vmem:[#allocation5 + $0x160] sm:$0xff]
        %v222 = vld [vmem:[#allocation5 + $0x168] sm:$0xff]
        %v223 = vld [vmem:[#allocation5 + $0x170] sm:$0xff]
        %v224 = vld [vmem:[#allocation5 + $0x178] sm:$0xff]
        %v225 = vld [vmem:[#allocation5 + $0x180] sm:$0xff]
        %v226 = vld [vmem:[#allocation5 + $0x188] sm:$0xff]
        %v227 = vld [vmem:[#allocation5 + $0x190] sm:$0xff]
        %v228 = vld [vmem:[#allocation5 + $0x198] sm:$0xff]
        %v229 = vld [vmem:[#allocation5 + $0x1a0] sm:$0xff]
        %v230 = vld [vmem:[#allocation5 + $0x1a8] sm:$0xff]
        %v231 = vld [vmem:[#allocation5 + $0x1b0] sm:$0xff]
        %v232 = vld [vmem:[#allocation5 + $0x1b8] sm:$0xff]
        %v233 = vld [vmem:[#allocation5 + $0x1c0] sm:$0xff]
        %v234 = vld [vmem:[#allocation5 + $0x1c8] sm:$0xff]
        %v235 = vld [vmem:[#allocation5 + $0x1d0] sm:$0xff]
        %v236 = vld [vmem:[#allocation5 + $0x1d8] sm:$0xff]
        %v237 = vld [vmem:[#allocation5 + $0x1e0] sm:$0xff]
        %v238 = vld [vmem:[#allocation5 + $0x1e8] sm:$0xff]
        %v239 = vld [vmem:[#allocation5 + $0x1f0] sm:$0xff]
        %v240 = vld [vmem:[#allocation5 + $0x1f8] sm:$0xff]
        %v241 = vlaneseq
        %v242 = vshrl.u32 %v241, 7
        %v243 = vsub.s32 0, %v242
        %v244 = vrot.slane %v175, %v243
        %v245 = vlaneseq
        %v246 = vshrl.u32 %v245, 7
        %v247 = vsub.s32 0, %v246
        %v248 = vrot.slane %v176, %v247
        %v249 = vmul.f32 %v244, %v177
        %v250 = vmul.f32 %v248, %v178
        %v251 = vmul.f32 %v244, %v179
        %v252 = vmul.f32 %v248, %v180
        %v253 = vmul.f32 %v244, %v209
        %v254 = vmul.f32 %v248, %v210
        %v255 = vmul.f32 %v244, %v211
        %v256 = vmul.f32 %v248, %v212
        %v257 = vlaneseq
        %v258 = vshrl.u32 %v257, 7
        %v259 = vsub.s32 1, %v258
        %v260 = vrot.slane %v175, %v259
        %v261 = vlaneseq
        %v262 = vshrl.u32 %v261, 7
        %v263 = vsub.s32 1, %v262
        %v264 = vrot.slane %v176, %v263
        %v265 = vmul.f32 %v260, %v181
        %v266 = vmul.f32 %v264, %v182
        %v267 = vmul.f32 %v260, %v183
        %v268 = vmul.f32 %v264, %v184
        %v269 = vmul.f32 %v260, %v213
        %v270 = vmul.f32 %v264, %v214
        %v271 = vmul.f32 %v260, %v215
        %v272 = vmul.f32 %v264, %v216
        %v273 = vadd.f32 %v249, %v265
        %v274 = vadd.f32 %v250, %v266
        %v275 = vadd.f32 %v251, %v267
        %v276 = vadd.f32 %v252, %v268
        %v277 = vadd.f32 %v253, %v269
        %v278 = vadd.f32 %v254, %v270
        %v279 = vadd.f32 %v255, %v271
        %v280 = vadd.f32 %v256, %v272
        %v281 = vlaneseq
        %v282 = vshrl.u32 %v281, 7
        %v283 = vsub.s32 2, %v282
        %v284 = vrot.slane %v175, %v283
        %v285 = vlaneseq
        %v286 = vshrl.u32 %v285, 7
        %v287 = vsub.s32 2, %v286
        %v288 = vrot.slane %v176, %v287
        %v289 = vmul.f32 %v284, %v185
        %v290 = vmul.f32 %v288, %v186
        %v291 = vmul.f32 %v284, %v187
        %v292 = vmul.f32 %v288, %v188
        %v293 = vmul.f32 %v284, %v217
        %v294 = vmul.f32 %v288, %v218
        %v295 = vmul.f32 %v284, %v219
        %v296 = vmul.f32 %v288, %v220
        %v297 = vadd.f32 %v273, %v289
        %v298 = vadd.f32 %v274, %v290
        %v299 = vadd.f32 %v275, %v291
        %v300 = vadd.f32 %v276, %v292
        %v301 = vadd.f32 %v277, %v293
        %v302 = vadd.f32 %v278, %v294
        %v303 = vadd.f32 %v279, %v295
        %v304 = vadd.f32 %v280, %v296
        %v305 = vlaneseq
        %v306 = vshrl.u32 %v305, 7
        %v307 = vsub.s32 3, %v306
        %v308 = vrot.slane %v175, %v307
        %v309 = vlaneseq
        %v310 = vshrl.u32 %v309, 7
        %v311 = vsub.s32 3, %v310
        %v312 = vrot.slane %v176, %v311
        %v313 = vmul.f32 %v308, %v189
        %v314 = vmul.f32 %v312, %v190
        %v315 = vmul.f32 %v308, %v191
        %v316 = vmul.f32 %v312, %v192
        %v317 = vmul.f32 %v308, %v221
        %v318 = vmul.f32 %v312, %v222
        %v319 = vmul.f32 %v308, %v223
        %v320 = vmul.f32 %v312, %v224
        %v321 = vadd.f32 %v297, %v313
        %v322 = vadd.f32 %v298, %v314
        %v323 = vadd.f32 %v299, %v315
        %v324 = vadd.f32 %v300, %v316
        %v325 = vadd.f32 %v301, %v317
        %v326 = vadd.f32 %v302, %v318
        %v327 = vadd.f32 %v303, %v319
        %v328 = vadd.f32 %v304, %v320
        %v329 = vlaneseq
        %v330 = vshrl.u32 %v329, 7
        %v331 = vsub.s32 4, %v330
        %v332 = vrot.slane %v175, %v331
        %v333 = vlaneseq
        %v334 = vshrl.u32 %v333, 7
        %v335 = vsub.s32 4, %v334
        %v336 = vrot.slane %v176, %v335
        %v337 = vmul.f32 %v332, %v193
        %v338 = vmul.f32 %v336, %v194
        %v339 = vmul.f32 %v332, %v195
        %v340 = vmul.f32 %v336, %v196
        %v341 = vmul.f32 %v332, %v225
        %v342 = vmul.f32 %v336, %v226
        %v343 = vmul.f32 %v332, %v227
        %v344 = vmul.f32 %v336, %v228
        %v345 = vadd.f32 %v321, %v337
        %v346 = vadd.f32 %v322, %v338
        %v347 = vadd.f32 %v323, %v339
        %v348 = vadd.f32 %v324, %v340
        %v349 = vadd.f32 %v325, %v341
        %v350 = vadd.f32 %v326, %v342
        %v351 = vadd.f32 %v327, %v343
        %v352 = vadd.f32 %v328, %v344
        %v353 = vlaneseq
        %v354 = vshrl.u32 %v353, 7
        %v355 = vsub.s32 5, %v354
        %v356 = vrot.slane %v175, %v355
        %v357 = vlaneseq
        %v358 = vshrl.u32 %v357, 7
        %v359 = vsub.s32 5, %v358
        %v360 = vrot.slane %v176, %v359
        %v361 = vmul.f32 %v356, %v197
        %v362 = vmul.f32 %v360, %v198
        %v363 = vmul.f32 %v356, %v199
        %v364 = vmul.f32 %v360, %v200
        %v365 = vmul.f32 %v356, %v229
        %v366 = vmul.f32 %v360, %v230
        %v367 = vmul.f32 %v356, %v231
        %v368 = vmul.f32 %v360, %v232
        %v369 = vadd.f32 %v345, %v361
        %v370 = vadd.f32 %v346, %v362
        %v371 = vadd.f32 %v347, %v363
        %v372 = vadd.f32 %v348, %v364
        %v373 = vadd.f32 %v349, %v365
        %v374 = vadd.f32 %v350, %v366
        %v375 = vadd.f32 %v351, %v367
        %v376 = vadd.f32 %v352, %v368
        %v377 = vlaneseq
        %v378 = vshrl.u32 %v377, 7
        %v379 = vsub.s32 6, %v378
        %v380 = vrot.slane %v175, %v379
        %v381 = vlaneseq
        %v382 = vshrl.u32 %v381, 7
        %v383 = vsub.s32 6, %v382
        %v384 = vrot.slane %v176, %v383
        %v385 = vmul.f32 %v380, %v201
        %v386 = vmul.f32 %v384, %v202
        %v387 = vmul.f32 %v380, %v203
        %v388 = vmul.f32 %v384, %v204
        %v389 = vmul.f32 %v380, %v233
        %v390 = vmul.f32 %v384, %v234
        %v391 = vmul.f32 %v380, %v235
        %v392 = vmul.f32 %v384, %v236
        %v393 = vadd.f32 %v369, %v385
        %v394 = vadd.f32 %v370, %v386
        %v395 = vadd.f32 %v371, %v387
        %v396 = vadd.f32 %v372, %v388
        %v397 = vadd.f32 %v373, %v389
        %v398 = vadd.f32 %v374, %v390
        %v399 = vadd.f32 %v375, %v391
        %v400 = vadd.f32 %v376, %v392
        %v401 = vlaneseq
        %v402 = vshrl.u32 %v401, 7
        %v403 = vsub.s32 7, %v402
        %v404 = vrot.slane %v175, %v403
        %v405 = vlaneseq
        %v406 = vshrl.u32 %v405, 7
        %v407 = vsub.s32 7, %v406
        %v408 = vrot.slane %v176, %v407
        %v409 = vmul.f32 %v404, %v205
        %v410 = vmul.f32 %v408, %v206
        %v411 = vmul.f32 %v404, %v207
        %v412 = vmul.f32 %v408, %v208
        %v413 = vmul.f32 %v404, %v237
        %v414 = vmul.f32 %v408, %v238
        %v415 = vmul.f32 %v404, %v239
        %v416 = vmul.f32 %v408, %v240
        %v417 = vadd.f32 %v393, %v409
        %v418 = vadd.f32 %v394, %v410
        %v419 = vadd.f32 %v395, %v411
        %v420 = vadd.f32 %v396, %v412
        %v421 = vadd.f32 %v397, %v413
        %v422 = vadd.f32 %v398, %v414
        %v423 = vadd.f32 %v399, %v415
        %v424 = vadd.f32 %v400, %v416
        %v425 = vmul.f32 %v417, 0.005
        %v426 = vmul.f32 %v418, 0.005
        %v427 = vmul.f32 %v419, 0.005
        %v428 = vmul.f32 %v420, 0.005
        %v429 = vmul.f32 %v421, 0.005
        %v430 = vmul.f32 %v422, 0.005
        %v431 = vmul.f32 %v423, 0.005
        %v432 = vmul.f32 %v424, 0.005
        %v433 = vadd.f32 %v425, %v426
        %434 = vadd.xlane.f32.xlu0 %v433
        %v435 = vpop.xlane.xlu0 %434
        %v436 = vadd.f32 %v427, %v428
        %437 = vadd.xlane.f32.xlu0 %v436
        %v438 = vpop.xlane.xlu0 %437
        %v439 = vadd.f32 %v429, %v430
        %440 = vadd.xlane.f32.xlu0 %v439
        %v441 = vpop.xlane.xlu0 %440
        %v442 = vadd.f32 %v431, %v432
        %443 = vadd.xlane.f32.xlu0 %v442
        %v444 = vpop.xlane.xlu0 %443
        %v445 = vmul.f32 %v435, %v435
        %v446 = vmul.f32 %v438, %v438
        %v447 = vmul.f32 %v441, %v441
        %v448 = vmul.f32 %v444, %v444
        %v453 = vlaneseq
        %v454 = vand.u32 %v453, 127
        %v455 = vlaneseq
        %v456 = vshrl.u32 %v455, 7
        %v457 = vsub.s32 %v454, %v456
        %v458 = vrot.slane %v445, %v457
        %v459 = vadd.s32 %v454, 4294967288
        %v460 = vlaneseq
        %v461 = vshrl.u32 %v460, 7
        %v462 = vsub.s32 %v459, %v461
        %v463 = vrot.slane %v446, %v462
        %vm464 = vcmask 130112
        %v465 = vsel %vm464, %v463, %v458
        %v466 = vlaneseq
        %v467 = vshrl.u32 %v466, 7
        %v468 = vsub.s32 %v454, %v467
        %v469 = vrot.slane %v447, %v468
        %v470 = vlaneseq
        %v471 = vshrl.u32 %v470, 7
        %v472 = vsub.s32 %v459, %v471
        %v473 = vrot.slane %v448, %v472
        %v474 = vsel %vm464, %v473, %v469
        %vm475 = vcmask 1041409
        %v476 = vsel %vm475, %v474, %v465
        %vm478 = vcmask 123904
        %v479 = vsel %vm478, %v476, 0.0
        %480 = vadd.xlane.f32.xlu0 %v479
        %v481 = vpop.xlane.xlu0 %480
        %v482 = vadd.f32 %v481, 1.0
        %v483 = vrcp.pop %v482
        %v484 = vmul.f32 %v481, %v483
        %v486 = vlaneseq
        %v487 = vshrl.u32 %v486, 7
        %v488 = vsub.s32 0, %v487
        %v489 = vrot.slane %v484, %v488
        %v490 = vlaneseq
        %v491 = vshrl.u32 %v490, 7
        %v492 = vsub.s32 1, %v491
        %v493 = vrot.slane %v484, %v492
        %v496 = vmul.f32 %v435, %v489
        %v497 = vmul.f32 %v438, %v489
        %v498 = vmul.f32 %v441, %v493
        %v499 = vmul.f32 %v444, %v493
        %v500 = vrsqrt.pop %v481
        %v502 = vlaneseq
        %v503 = vshrl.u32 %v502, 7
        %v504 = vsub.s32 0, %v503
        %v505 = vrot.slane %v500, %v504
        %v506 = vlaneseq
        %v507 = vshrl.u32 %v506, 7
        %v508 = vsub.s32 1, %v507
        %v509 = vrot.slane %v500, %v508
        %v512 = vmul.f32 %v496, %v505
        %v513 = vmul.f32 %v497, %v505
        %v514 = vmul.f32 %v498, %v509
        %v515 = vmul.f32 %v499, %v509
        %v516 = vadd.s32 %v454, 128
        %vm517 = vcmp.lt.s32.totalorder %v454, 200
        %vm518 = vcmp.lt.s32.totalorder %v516, 200
        %v519 = vsel %vm517, 0.0, -1e+30
        %v520 = vsel %vm518, 0.0, -1e+30
        %522 = vset.pattern.permute.xlu0 0
        %523 = vperm.xlu0 %522, %v512
        %v524 = vpop.permute.xlu0 %523
        %527 = vset.pattern.permute.xlu0 0
        %528 = vperm.xlu0 %527, %v513
        %v529 = vpop.permute.xlu0 %528
        %532 = vset.pattern.permute.xlu0 0
        %533 = vperm.xlu0 %532, %v514
        %v534 = vpop.permute.xlu0 %533
        %537 = vset.pattern.permute.xlu0 0
        %538 = vperm.xlu0 %537, %v515
        %v539 = vpop.permute.xlu0 %538
        %v541 = vmul.f32 %v417, %v524
        %v542 = vmul.f32 %v418, %v524
        %v543 = vmul.f32 %v419, %v529
        %v544 = vmul.f32 %v420, %v529
        %v545 = vmul.f32 %v421, %v534
        %v546 = vmul.f32 %v422, %v534
        %v547 = vmul.f32 %v423, %v539
        %v548 = vmul.f32 %v424, %v539
        %v549 = vadd.f32 %v541, %v543
        %v550 = vrot.slane %v549, 4
        %v551 = vadd.f32 %v549, %v550
        %v552 = vrot.slane %v551, 2
        %v553 = vadd.f32 %v551, %v552
        %v554 = vrot.slane %v553, 1
        %v555 = vadd.f32 %v553, %v554
        %v556 = vadd.f32 %v542, %v544
        %v557 = vrot.slane %v556, 4
        %v558 = vadd.f32 %v556, %v557
        %v559 = vrot.slane %v558, 2
        %v560 = vadd.f32 %v558, %v559
        %v561 = vrot.slane %v560, 1
        %v562 = vadd.f32 %v560, %v561
        %v563 = vadd.f32 %v545, %v547
        %v564 = vrot.slane %v563, 4
        %v565 = vadd.f32 %v563, %v564
        %v566 = vrot.slane %v565, 2
        %v567 = vadd.f32 %v565, %v566
        %v568 = vrot.slane %v567, 1
        %v569 = vadd.f32 %v567, %v568
        %v570 = vadd.f32 %v546, %v548
        %v571 = vrot.slane %v570, 4
        %v572 = vadd.f32 %v570, %v571
        %v573 = vrot.slane %v572, 2
        %v574 = vadd.f32 %v572, %v573
        %v575 = vrot.slane %v574, 1
        %v576 = vadd.f32 %v574, %v575
        %v581 = vsel %vm475, %v569, %v555
        %v582 = vsel %vm475, %v576, %v562
        %v585 = vadd.f32 %v519, %v581
        %v586 = vadd.f32 %v520, %v582
        %vm587 = vcmask 1041408
        %v588 = vsel %vm587, %v585, -inf
        %v589 = vsel %vm587, %v586, -inf
        %v590 = vmax.f32 %v588, %v589
        %591 = vmax.xlane.f32.xlu0 %v590
        %v592 = vpop.xlane.xlu0 %591
        %v593 = vsub.f32 %v585, %v592
        %v594 = vsub.f32 %v586, %v592
        %v595 = vmul.f32 %v593, 1.442695
        %v596 = vpow.pop %v595
        %v597 = vmul.f32 %v594, 1.442695
        %v598 = vpow.pop %v597
        %v599 = vsel %vm587, %v596, 0.0
        %v600 = vsel %vm587, %v598, 0.0
        %v601 = vadd.f32 %v599, %v600
        %602 = vadd.xlane.f32.xlu0 %v601
        %v603 = vpop.xlane.xlu0 %602
        %v604 = vrcp.pop %v603
        %v605 = vmul.f32 %v596, %v604
        %v606 = vmul.f32 %v598, %v604
        %v609 = vcombine.low %v605, %v606
        %v611 = vunpack.c.l.s4 1966171168
        %v612 = vunpack.c.0.s8 %v611
        %v613 = vlaneseq
        %v614 = vshrl.u32 %v613, 7
        %v615 = vsub.s32 %v612, %v614
        %v616 = vrot.slane %v609, %v615
        %v617 = vcombine.high %v616, %v616
        %v619 = vunpack.c.l.s4 1966171168
        %v620 = vunpack.c.0.s8 %v619
        %v621 = vlaneseq
        %v622 = vshrl.u32 %v621, 7
        %v623 = vsub.s32 %v620, %v622
        %v624 = vrot.slane %v616, %v623
        %v626 = vunpack.c.l.s4 1966171168
        %v627 = vunpack.c.0.s8 %v626
        %v628 = vlaneseq
        %v629 = vshrl.u32 %v628, 7
        %v630 = vsub.s32 %v627, %v629
        %v631 = vrot.slane %v617, %v630
        %v632 = vlaneseq
        %v633 = vshrl.u32 %v632, 7
        %v634 = vsub.s32 0, %v633
        %v635 = vrot.slane %v624, %v634
        %v636 = vlaneseq
        %v637 = vshrl.u32 %v636, 7
        %v638 = vsub.s32 1, %v637
        %v639 = vrot.slane %v624, %v638
        %v640 = vlaneseq
        %v641 = vshrl.u32 %v640, 7
        %v642 = vsub.s32 0, %v641
        %v643 = vrot.slane %v631, %v642
        %v644 = vlaneseq
        %v645 = vshrl.u32 %v644, 7
        %v646 = vsub.s32 1, %v645
        %v647 = vrot.slane %v631, %v646
        %v652 = vmul.f32 %v635, %v417
        %v653 = vmul.f32 %v639, %v418
        %v654 = vmul.f32 %v635, %v419
        %v655 = vmul.f32 %v639, %v420
        %v656 = vmul.f32 %v643, %v421
        %v657 = vmul.f32 %v647, %v422
        %v658 = vmul.f32 %v643, %v423
        %v659 = vmul.f32 %v647, %v424
        %v660 = vadd.f32 %v652, %v653
        %661 = vadd.xlane.f32.xlu0 %v660
        %v662 = vpop.xlane.xlu0 %661
        %v663 = vadd.f32 %v654, %v655
        %664 = vadd.xlane.f32.xlu0 %v663
        %v665 = vpop.xlane.xlu0 %664
        %v666 = vadd.f32 %v656, %v657
        %667 = vadd.xlane.f32.xlu0 %v666
        %v668 = vpop.xlane.xlu0 %667
        %v669 = vadd.f32 %v658, %v659
        %670 = vadd.xlane.f32.xlu0 %v669
        %v671 = vpop.xlane.xlu0 %670
        %v672 = vmul.f32 %v662, %v662
        %v673 = vmul.f32 %v665, %v665
        %v674 = vmul.f32 %v668, %v668
        %v675 = vmul.f32 %v671, %v671
        %v680 = vlaneseq
        %v681 = vshrl.u32 %v680, 7
        %v682 = vsub.s32 %v454, %v681
        %v683 = vrot.slane %v672, %v682
        %v684 = vlaneseq
        %v685 = vshrl.u32 %v684, 7
        %v686 = vsub.s32 %v459, %v685
        %v687 = vrot.slane %v673, %v686
        %v688 = vsel %vm464, %v687, %v683
        %v689 = vlaneseq
        %v690 = vshrl.u32 %v689, 7
        %v691 = vsub.s32 %v454, %v690
        %v692 = vrot.slane %v674, %v691
        %v693 = vlaneseq
        %v694 = vshrl.u32 %v693, 7
        %v695 = vsub.s32 %v459, %v694
        %v696 = vrot.slane %v675, %v695
        %v697 = vsel %vm464, %v696, %v692
        %v698 = vsel %vm475, %v697, %v688
        %v700 = vsel %vm478, %v698, 0.0
        %701 = vadd.xlane.f32.xlu0 %v700
        %v702 = vpop.xlane.xlu0 %701
        %v703 = vadd.f32 %v702, 1.0
        %v704 = vrcp.pop %v703
        %v705 = vmul.f32 %v702, %v704
        %v707 = vlaneseq
        %v708 = vshrl.u32 %v707, 7
        %v709 = vsub.s32 0, %v708
        %v710 = vrot.slane %v705, %v709
        %v711 = vlaneseq
        %v712 = vshrl.u32 %v711, 7
        %v713 = vsub.s32 1, %v712
        %v714 = vrot.slane %v705, %v713
        %v717 = vmul.f32 %v662, %v710
        %v718 = vmul.f32 %v665, %v710
        %v719 = vmul.f32 %v668, %v714
        %v720 = vmul.f32 %v671, %v714
        %v721 = vrsqrt.pop %v702
        %v723 = vlaneseq
        %v724 = vshrl.u32 %v723, 7
        %v725 = vsub.s32 0, %v724
        %v726 = vrot.slane %v721, %v725
        %v727 = vlaneseq
        %v728 = vshrl.u32 %v727, 7
        %v729 = vsub.s32 1, %v728
        %v730 = vrot.slane %v721, %v729
        %v733 = vmul.f32 %v717, %v726
        %v734 = vmul.f32 %v718, %v726
        %v735 = vmul.f32 %v719, %v730
        %v736 = vmul.f32 %v720, %v730
        %738 = vset.pattern.permute.xlu0 0
        %739 = vperm.xlu0 %738, %v733
        %v740 = vpop.permute.xlu0 %739
        %743 = vset.pattern.permute.xlu0 0
        %744 = vperm.xlu0 %743, %v734
        %v745 = vpop.permute.xlu0 %744
        %748 = vset.pattern.permute.xlu0 0
        %749 = vperm.xlu0 %748, %v735
        %v750 = vpop.permute.xlu0 %749
        %753 = vset.pattern.permute.xlu0 0
        %754 = vperm.xlu0 %753, %v736
        %v755 = vpop.permute.xlu0 %754
        %v757 = vmul.f32 %v417, %v740
        %v758 = vmul.f32 %v418, %v740
        %v759 = vmul.f32 %v419, %v745
        %v760 = vmul.f32 %v420, %v745
        %v761 = vmul.f32 %v421, %v750
        %v762 = vmul.f32 %v422, %v750
        %v763 = vmul.f32 %v423, %v755
        %v764 = vmul.f32 %v424, %v755
        %v765 = vadd.f32 %v757, %v759
        %v766 = vrot.slane %v765, 4
        %v767 = vadd.f32 %v765, %v766
        %v768 = vrot.slane %v767, 2
        %v769 = vadd.f32 %v767, %v768
        %v770 = vrot.slane %v769, 1
        %v771 = vadd.f32 %v769, %v770
        %v772 = vadd.f32 %v758, %v760
        %v773 = vrot.slane %v772, 4
        %v774 = vadd.f32 %v772, %v773
        %v775 = vrot.slane %v774, 2
        %v776 = vadd.f32 %v774, %v775
        %v777 = vrot.slane %v776, 1
        %v778 = vadd.f32 %v776, %v777
        %v779 = vadd.f32 %v761, %v763
        %v780 = vrot.slane %v779, 4
        %v781 = vadd.f32 %v779, %v780
        %v782 = vrot.slane %v781, 2
        %v783 = vadd.f32 %v781, %v782
        %v784 = vrot.slane %v783, 1
        %v785 = vadd.f32 %v783, %v784
        %v786 = vadd.f32 %v762, %v764
        %v787 = vrot.slane %v786, 4
        %v788 = vadd.f32 %v786, %v787
        %v789 = vrot.slane %v788, 2
        %v790 = vadd.f32 %v788, %v789
        %v791 = vrot.slane %v790, 1
        %v792 = vadd.f32 %v790, %v791
        %v797 = vsel %vm475, %v785, %v771
        %v798 = vsel %vm475, %v792, %v778
        %v801 = vadd.f32 %v585, %v797
        %v802 = vadd.f32 %v586, %v798
        %v803 = vsel %vm587, %v801, -inf
        %v804 = vsel %vm587, %v802, -inf
        %v805 = vmax.f32 %v803, %v804
        %806 = vmax.xlane.f32.xlu0 %v805
        %v807 = vpop.xlane.xlu0 %806
        %v808 = vsub.f32 %v801, %v807
        %v809 = vsub.f32 %v802, %v807
        %v810 = vmul.f32 %v808, 1.442695
        %v811 = vpow.pop %v810
        %v812 = vmul.f32 %v809, 1.442695
        %v813 = vpow.pop %v812
        %v814 = vsel %vm587, %v811, 0.0
        %v815 = vsel %vm587, %v813, 0.0
        %v816 = vadd.f32 %v814, %v815
        %817 = vadd.xlane.f32.xlu0 %v816
        %v818 = vpop.xlane.xlu0 %817
        %v819 = vrcp.pop %v818
        %v820 = vmul.f32 %v811, %v819
        %v821 = vmul.f32 %v813, %v819
        %v824 = vcombine.low %v820, %v821
        %v826 = vunpack.c.l.s4 1966171168
        %v827 = vunpack.c.0.s8 %v826
        %v828 = vlaneseq
        %v829 = vshrl.u32 %v828, 7
        %v830 = vsub.s32 %v827, %v829
        %v831 = vrot.slane %v824, %v830
        %v832 = vcombine.high %v831, %v831
        %v834 = vunpack.c.l.s4 1966171168
        %v835 = vunpack.c.0.s8 %v834
        %v836 = vlaneseq
        %v837 = vshrl.u32 %v836, 7
        %v838 = vsub.s32 %v835, %v837
        %v839 = vrot.slane %v831, %v838
        %v841 = vunpack.c.l.s4 1966171168
        %v842 = vunpack.c.0.s8 %v841
        %v843 = vlaneseq
        %v844 = vshrl.u32 %v843, 7
        %v845 = vsub.s32 %v842, %v844
        %v846 = vrot.slane %v832, %v845
        %v847 = vlaneseq
        %v848 = vshrl.u32 %v847, 7
        %v849 = vsub.s32 0, %v848
        %v850 = vrot.slane %v839, %v849
        %v851 = vlaneseq
        %v852 = vshrl.u32 %v851, 7
        %v853 = vsub.s32 1, %v852
        %v854 = vrot.slane %v839, %v853
        %v855 = vlaneseq
        %v856 = vshrl.u32 %v855, 7
        %v857 = vsub.s32 0, %v856
        %v858 = vrot.slane %v846, %v857
        %v859 = vlaneseq
        %v860 = vshrl.u32 %v859, 7
        %v861 = vsub.s32 1, %v860
        %v862 = vrot.slane %v846, %v861
        %v867 = vmul.f32 %v850, %v417
        %v868 = vmul.f32 %v854, %v418
        %v869 = vmul.f32 %v850, %v419
        %v870 = vmul.f32 %v854, %v420
        %v871 = vmul.f32 %v858, %v421
        %v872 = vmul.f32 %v862, %v422
        %v873 = vmul.f32 %v858, %v423
        %v874 = vmul.f32 %v862, %v424
        %v875 = vadd.f32 %v867, %v868
        %876 = vadd.xlane.f32.xlu0 %v875
        %v877 = vpop.xlane.xlu0 %876
        %v878 = vadd.f32 %v869, %v870
        %879 = vadd.xlane.f32.xlu0 %v878
        %v880 = vpop.xlane.xlu0 %879
        %v881 = vadd.f32 %v871, %v872
        %882 = vadd.xlane.f32.xlu0 %v881
        %v883 = vpop.xlane.xlu0 %882
        %v884 = vadd.f32 %v873, %v874
        %885 = vadd.xlane.f32.xlu0 %v884
        %v886 = vpop.xlane.xlu0 %885
        %v887 = vmul.f32 %v877, %v877
        %v888 = vmul.f32 %v880, %v880
        %v889 = vmul.f32 %v883, %v883
        %v890 = vmul.f32 %v886, %v886
        %v895 = vlaneseq
        %v896 = vshrl.u32 %v895, 7
        %v897 = vsub.s32 %v454, %v896
        %v898 = vrot.slane %v887, %v897
        %v899 = vlaneseq
        %v900 = vshrl.u32 %v899, 7
        %v901 = vsub.s32 %v459, %v900
        %v902 = vrot.slane %v888, %v901
        %v903 = vsel %vm464, %v902, %v898
        %v904 = vlaneseq
        %v905 = vshrl.u32 %v904, 7
        %v906 = vsub.s32 %v454, %v905
        %v907 = vrot.slane %v889, %v906
        %v908 = vlaneseq
        %v909 = vshrl.u32 %v908, 7
        %v910 = vsub.s32 %v459, %v909
        %v911 = vrot.slane %v890, %v910
        %v912 = vsel %vm464, %v911, %v907
        %v913 = vsel %vm475, %v912, %v903
        %v915 = vsel %vm478, %v913, 0.0
        %916 = vadd.xlane.f32.xlu0 %v915
        %v917 = vpop.xlane.xlu0 %916
        %v918 = vadd.f32 %v917, 1.0
        %v919 = vrcp.pop %v918
        %v920 = vmul.f32 %v917, %v919
        %v922 = vlaneseq
        %v923 = vshrl.u32 %v922, 7
        %v924 = vsub.s32 0, %v923
        %v925 = vrot.slane %v920, %v924
        %v926 = vlaneseq
        %v927 = vshrl.u32 %v926, 7
        %v928 = vsub.s32 1, %v927
        %v929 = vrot.slane %v920, %v928
        %v932 = vmul.f32 %v877, %v925
        %v933 = vmul.f32 %v880, %v925
        %v934 = vmul.f32 %v883, %v929
        %v935 = vmul.f32 %v886, %v929
        %v936 = vrsqrt.pop %v917
        %v938 = vlaneseq
        %v939 = vshrl.u32 %v938, 7
        %v940 = vsub.s32 0, %v939
        %v941 = vrot.slane %v936, %v940
        %v942 = vlaneseq
        %v943 = vshrl.u32 %v942, 7
        %v944 = vsub.s32 1, %v943
        %v945 = vrot.slane %v936, %v944
        %v948 = vmul.f32 %v932, %v941
        %v949 = vmul.f32 %v933, %v941
        %v950 = vmul.f32 %v934, %v945
        %v951 = vmul.f32 %v935, %v945
        %956 = vset.pattern.permute.xlu0 0
        %957 = vperm.xlu0 %956, %v948
        %v958 = vpop.permute.xlu0 %957
        %959 = vset.pattern.permute.xlu0 0
        %960 = vperm.xlu0 %959, %v949
        %v961 = vpop.permute.xlu0 %960
        %962 = vset.pattern.permute.xlu0 0
        %963 = vperm.xlu0 %962, %v950
        %v964 = vpop.permute.xlu0 %963
        %965 = vset.pattern.permute.xlu0 0
        %966 = vperm.xlu0 %965, %v951
        %v967 = vpop.permute.xlu0 %966
        %v968 = vlaneseq
        %v969 = vshrl.u32 %v968, 7
        %v970 = vsub.s32 %v454, %v969
        %v971 = vrot.slane %v958, %v970
        %v972 = vlaneseq
        %v973 = vshrl.u32 %v972, 7
        %v974 = vsub.s32 %v459, %v973
        %v975 = vrot.slane %v961, %v974
        %v976 = vsel %vm464, %v975, %v971
        %v977 = vlaneseq
        %v978 = vshrl.u32 %v977, 7
        %v979 = vsub.s32 %v454, %v978
        %v980 = vrot.slane %v964, %v979
        %v981 = vlaneseq
        %v982 = vshrl.u32 %v981, 7
        %v983 = vsub.s32 %v459, %v982
        %v984 = vrot.slane %v967, %v983
        %v985 = vsel %vm464, %v984, %v980
        %v986 = vsel %vm475, %v985, %v976
        %988 = vst.msk [vmem:[%s174] sm:$0x3] %vm478, %v986
        %s989 = sand.u32 %s75, 1
        %s990 = scalar_lea.sflag [#allocation4], %s989
        %s991 = sand.u32 %s75, 1
        %s992 = smul.addr %s991, 2
        %s993 = scalar_lea.vmem [#allocation7], %s992
        // Predicated region
        $region37: #{tpu_custom_call.1} parent=27 // pred_check
          %p994 = pneg %p85
        $region38: #{tpu_custom_call.1} parent=27 // pred_check_branch
          %996 = sbr.rel (%p994) target = $region40
        $region39: #{tpu_custom_call.1} parent=27 // pred_region
          %s998 = ssub.s32 32, 32
          %999 = vsyncadd %s990, %s998
          %s1000 = smul.addr %s20, 32
          %s1001 = scalar_lea.hbm %s2, %s1000
          %s1003 = sshll.u32 %s993, 4
          %s1004 = int_to_ptr.vmem [resolvable:$true] %s1003
          %1006 = dma.vmem_to_hbm [thread:$0]  %s1004, 32, %s1001, %s990
        $region40: #{tpu_custom_call.1} parent=27 // pred_fallthru
          _
      $region28: #{tpu_custom_call.1} parent=5 // pred_fallthru
        _
      %p1007 = scmp.le.s32.totalorder 2, %s15
      // Predicated region
      $region41: #{tpu_custom_call.1} parent=5 // pred_check
        %p1008 = pneg %p1007
      $region42: #{tpu_custom_call.1} parent=5 // pred_check_branch
        %1010 = sbr.rel (%p1008) target = $region44
      $region43: #{tpu_custom_call.1} parent=5 // pred_region
        %s1011 = ssub.s32 %s15, 2
        // Predicated region
        $region45: #{tpu_custom_call.1} parent=43 // pred_check
          %p1012 = pneg %p91
        $region46: #{tpu_custom_call.1} parent=43 // pred_check_branch
          %1014 = sbr.rel (%p1012) target = $region48
        $region47: #{tpu_custom_call.1} parent=43 // pred_region
          %s1015 = sand.u32 %s76, 1
          %s1016 = scalar_lea.sflag [#allocation4], %s1015
          %s1017 = sand.u32 %s76, 1
          %s1018 = smul.addr %s1017, 2
          %s1019 = scalar_lea.vmem [#allocation7], %s1018
          %1020 = dma.done %s1016, 32
        $region48: #{tpu_custom_call.1} parent=43 // pred_fallthru
          _
      $region44: #{tpu_custom_call.1} parent=5 // pred_fallthru
        _
    $region6: #{tpu_custom_call.1} parent=1 // loop_footer
      %s19 = sadd.s32 1, %s15
    $region7: #{tpu_custom_call.1} parent=1 // loop_footer_branch
      %14 = sbr.rel target = $region3
    $region8: #{tpu_custom_call.1} parent=1 // loop_exit
      _
    %1021 = vsyncpa [#allocation3], 1
    %s1022 = scalar_lea.sflag [#allocation3], 1
    %1023 = vsyncpa %s1022, 1
    %1024 = vsyncpa [#allocation6], 1
    %1025 = vsyncpa [#allocation4], 1
    %s1026 = scalar_lea.sflag [#allocation4], 1
    %1027 = vsyncpa %s1026, 1

</llo_original>
